<compile_context>
chip_gen: v7x
topology: tpu7x:2x2x1
jax: 0.10.0
libtpu: 0.0.40
codegen_flags: <defaults>
</compile_context>

<pallas_src>
import functools

import jax
import jax.numpy as jnp
from jax.experimental import pallas as pl
from jax.experimental.pallas import tpu as pltpu


def _kl_loss_kernel(ps_ref, pt_ref, lab_ref, out_ref, *, hw, hw_tile, need_mask):
    # Blocks are (C, hw_tile); inputs stream through HBM in their native dtype
    # and are cast to f32 only inside the kernel.
    ps = ps_ref[...].astype(jnp.float32)
    pt = pt_ref[...].astype(jnp.float32)
    lab = lab_ref[...].astype(jnp.float32)

    # Stable log-softmax / softmax of pred_s over the channel (sublane) axis.
    ps_shift = ps - jnp.max(ps, axis=0, keepdims=True)
    e_s = jnp.exp(ps_shift)
    sum_s = jnp.sum(e_s, axis=0, keepdims=True)
    # Reuse e_s for prob_s (no second full-tensor exp); exact reciprocal keeps
    # the result numerically aligned with the jax.nn / torch reference.
    prob_s = e_s * pl.reciprocal(sum_s)
    logsm_s = ps_shift - jnp.log(sum_s)

    # Stable log-softmax of pred_t.
    pt_shift = pt - jnp.max(pt, axis=0, keepdims=True)
    logsm_t = pt_shift - jnp.log(jnp.sum(jnp.exp(pt_shift), axis=0, keepdims=True))

    cls_elem = -lab * logsm_s        # (C, hw_tile)
    con_elem = -prob_s * logsm_t     # (C, hw_tile)

    if need_mask:
        # Ragged last tile along H*W: zero out contributions past the end.
        j = pl.program_id(1)
        lane = jax.lax.broadcasted_iota(jnp.int32, cls_elem.shape, 1)
        valid = (j * hw_tile + lane) < hw
        cls_elem = jnp.where(valid, cls_elem, 0.0)
        con_elem = jnp.where(valid, con_elem, 0.0)

    cls_part = jnp.sum(cls_elem)
    con_part = jnp.sum(con_elem)

    # Lane-dense (2, 128) partial-sum block: row 0 = classification partial,
    # row 1 = consistency partial (broadcast across lanes; wrapper reads lane 0).
    row = jax.lax.broadcasted_iota(jnp.int32, (2, 128), 0)
    out_ref[...] = jnp.where(row == 0, cls_part, con_part)


def _choose_hw_tile(hw, c, itemsize, target_block_bytes=1 << 20):
    """Pick the H*W tile width: large, lane-aligned, VMEM-budgeted per tensor."""
    max_lanes = max(128, target_block_bytes // max(1, c * itemsize))
    if hw <= max_lanes:
        # Single tile covering full H*W (legal even if not a multiple of 128).
        return hw, False
    tile = (max_lanes // 128) * 128           # multiple of 128
    return tile, (hw % tile) != 0             # mask only the ragged last tile


def kl_loss(pred_s, pred_t, labels):
    """Returns (classification_loss, consistence_loss), both scalar f32."""
    N, C, H, W = pred_s.shape
    HW = H * W

    # Free layout change: NCHW -> (N, C, H*W); channels on sublanes, H*W on lanes.
    ps = pred_s.reshape(N, C, HW)
    pt = pred_t.reshape(N, C, HW)
    lab = labels.reshape(N, C, HW)

    max_itemsize = max(ps.dtype.itemsize, pt.dtype.itemsize, lab.dtype.itemsize)
    hw_tile, need_mask = _choose_hw_tile(HW, C, max_itemsize)
    grid_hw = (HW + hw_tile - 1) // hw_tile

    kernel = functools.partial(
        _kl_loss_kernel, hw=HW, hw_tile=hw_tile, need_mask=need_mask)

    in_spec = pl.BlockSpec((None, C, hw_tile), lambda n, j: (n, 0, j))
    out_spec = pl.BlockSpec((None, None, 2, 128), lambda n, j: (n, j, 0, 0))

    partials = pl.pallas_call(
        kernel,
        out_shape=jax.ShapeDtypeStruct((N, grid_hw, 2, 128), jnp.float32),
        grid_spec=pltpu.PrefetchScalarGridSpec(
            num_scalar_prefetch=0,
            grid=(N, grid_hw),
            in_specs=[in_spec, in_spec, in_spec],
            out_specs=out_spec,
        ),
        compiler_params=pltpu.CompilerParams(
            dimension_semantics=("parallel", "parallel"),
            vmem_limit_bytes=32 * 1024 * 1024),
    )(ps, pt, lab)

    inv_count = 1.0 / float(N * C * H * W)   # torch.mean divides by all elements
    cls = jnp.sum(partials[:, :, 0, 0]) * inv_count
    con = jnp.sum(partials[:, :, 1, 0]) * inv_count
    return cls, con


def _reference(pred_s, pred_t, labels):
    prob_s = jax.nn.softmax(pred_s, axis=1)
    cls = jnp.mean(-labels * jax.nn.log_softmax(pred_s, axis=1))
    con = jnp.mean(-prob_s * jax.nn.log_softmax(pred_t, axis=1))
    return cls, con


if __name__ == "__main__":
    key = jax.random.PRNGKey(0)
    k1, k2, k3 = jax.random.split(key, 3)

    N, C, H, W = 2, 4, 16, 16
    pred_s = jax.random.normal(k1, (N, C, H, W), dtype=jnp.float32)
    pred_t = jax.random.normal(k2, (N, C, H, W), dtype=jnp.float32)
    # soft labels (same shape as predictions, sum to 1 along channel dim)
    labels = jax.nn.softmax(
        jax.random.normal(k3, (N, C, H, W), dtype=jnp.float32), axis=1)

    cls_loss, con_loss = jax.jit(kl_loss)(pred_s, pred_t, labels)
    cls_loss = jax.block_until_ready(cls_loss)
    con_loss = jax.block_until_ready(con_loss)

    cls_ref, con_ref = _reference(pred_s, pred_t, labels)
    assert jnp.allclose(cls_loss, cls_ref, rtol=1e-5, atol=1e-5), (cls_loss, cls_ref)
    assert jnp.allclose(con_loss, con_ref, rtol=1e-5, atol=1e-5), (con_loss, con_ref)

    print("KERNEL_OK")
</pallas_src>

<mosaic_0001>
module attributes {stable_mosaic.version = 11 : i64} {
  func.func @_kl_loss_kernel(%arg0: i32, %arg1: i32, %arg2: memref<1x4x256xf32, #tpu.memory_space<vmem>>, %arg3: memref<1x4x256xf32, #tpu.memory_space<vmem>>, %arg4: memref<1x4x256xf32, #tpu.memory_space<vmem>>, %arg5: memref<1x1x2x128xf32, #tpu.memory_space<vmem>>) attributes {dimension_semantics = [#tpu.dimension_semantics<parallel>, #tpu.dimension_semantics<parallel>], iteration_bounds = array<i64: 2, 1>, scalar_prefetch = 0 : i64, scratch_operands = 0 : i64, tpu.core_type = #tpu.core_type<tc>, window_params = [{transform_indices = @transform_0, window_bounds = array<i64: 1, 4, 256>}, {transform_indices = @transform_1, window_bounds = array<i64: 1, 4, 256>}, {transform_indices = @transform_2, window_bounds = array<i64: 1, 4, 256>}, {transform_indices = @transform_3, window_bounds = array<i64: 1, 1, 2, 128>}]} {
    %c0 = arith.constant 0 : index
    %c0_0 = arith.constant 0 : index
    %c0_1 = arith.constant 0 : index
    %0 = vector.load %arg2[%c0, %c0_0, %c0_1] : memref<1x4x256xf32, #tpu.memory_space<vmem>>, vector<1x4x256xf32>
    %1 = vector.shape_cast %0 : vector<1x4x256xf32> to vector<4x256xf32>
    %c0_2 = arith.constant 0 : index
    %c0_3 = arith.constant 0 : index
    %c0_4 = arith.constant 0 : index
    %2 = vector.load %arg3[%c0_2, %c0_3, %c0_4] : memref<1x4x256xf32, #tpu.memory_space<vmem>>, vector<1x4x256xf32>
    %3 = vector.shape_cast %2 : vector<1x4x256xf32> to vector<4x256xf32>
    %c0_5 = arith.constant 0 : index
    %c0_6 = arith.constant 0 : index
    %c0_7 = arith.constant 0 : index
    %4 = vector.load %arg4[%c0_5, %c0_6, %c0_7] : memref<1x4x256xf32, #tpu.memory_space<vmem>>, vector<1x4x256xf32>
    %5 = vector.shape_cast %4 : vector<1x4x256xf32> to vector<4x256xf32>
    %cst = arith.constant dense<0xFF800000> : vector<256xf32>
    %6 = vector.multi_reduction <maximumf>, %1, %cst [0] : vector<4x256xf32> to vector<256xf32>
    %7 = vector.shape_cast %6 : vector<256xf32> to vector<1x256xf32>
    %8 = vector.broadcast %7 : vector<1x256xf32> to vector<4x256xf32>
    %9 = arith.subf %1, %8 : vector<4x256xf32>
    %10 = math.exp %9 : vector<4x256xf32>
    %cst_8 = arith.constant dense<0.000000e+00> : vector<256xf32>
    %11 = vector.multi_reduction <add>, %10, %cst_8 [0] : vector<4x256xf32> to vector<256xf32>
    %12 = vector.shape_cast %11 : vector<256xf32> to vector<1x256xf32>
    %13 = tpu.reciprocal %12 : vector<1x256xf32> -> vector<1x256xf32>
    %14 = vector.broadcast %13 : vector<1x256xf32> to vector<4x256xf32>
    %15 = arith.mulf %10, %14 : vector<4x256xf32>
    %16 = math.log %12 : vector<1x256xf32>
    %17 = vector.broadcast %16 : vector<1x256xf32> to vector<4x256xf32>
    %18 = arith.subf %9, %17 : vector<4x256xf32>
    %cst_9 = arith.constant dense<0xFF800000> : vector<256xf32>
    %19 = vector.multi_reduction <maximumf>, %3, %cst_9 [0] : vector<4x256xf32> to vector<256xf32>
    %20 = vector.shape_cast %19 : vector<256xf32> to vector<1x256xf32>
    %21 = vector.broadcast %20 : vector<1x256xf32> to vector<4x256xf32>
    %22 = arith.subf %3, %21 : vector<4x256xf32>
    %23 = math.exp %22 : vector<4x256xf32>
    %cst_10 = arith.constant dense<0.000000e+00> : vector<256xf32>
    %24 = vector.multi_reduction <add>, %23, %cst_10 [0] : vector<4x256xf32> to vector<256xf32>
    %25 = vector.shape_cast %24 : vector<256xf32> to vector<1x256xf32>
    %26 = math.log %25 : vector<1x256xf32>
    %27 = vector.broadcast %26 : vector<1x256xf32> to vector<4x256xf32>
    %28 = arith.subf %22, %27 : vector<4x256xf32>
    %cst_11 = arith.constant 0.000000e+00 : f32
    %29 = vector.broadcast %cst_11 : f32 to vector<4x256xf32>
    %30 = arith.subf %29, %5 : vector<4x256xf32>
    %31 = arith.mulf %30, %18 : vector<4x256xf32>
    %cst_12 = arith.constant 0.000000e+00 : f32
    %32 = vector.broadcast %cst_12 : f32 to vector<4x256xf32>
    %33 = arith.subf %32, %15 : vector<4x256xf32>
    %34 = arith.mulf %33, %28 : vector<4x256xf32>
    %35 = vector.shape_cast %31 : vector<4x256xf32> to vector<1x4x256xf32>
    %cst_13 = arith.constant dense<0.000000e+00> : vector<1xf32>
    %36 = vector.multi_reduction <add>, %35, %cst_13 [1, 2] : vector<1x4x256xf32> to vector<1xf32>
    %37 = vector.shape_cast %36 : vector<1xf32> to vector<1x1x1xf32>
    %38 = vector.extract %37[0, 0, 0] : f32 from vector<1x1x1xf32>
    %39 = vector.shape_cast %34 : vector<4x256xf32> to vector<1x4x256xf32>
    %cst_14 = arith.constant dense<0.000000e+00> : vector<1xf32>
    %40 = vector.multi_reduction <add>, %39, %cst_14 [1, 2] : vector<1x4x256xf32> to vector<1xf32>
    %41 = vector.shape_cast %40 : vector<1xf32> to vector<1x1x1xf32>
    %42 = vector.extract %41[0, 0, 0] : f32 from vector<1x1x1xf32>
    %43 = tpu.iota {dimensions = array<i32: 0>} : vector<2x128xi32>
    %c0_i32 = arith.constant 0 : i32
    %44 = vector.broadcast %c0_i32 : i32 to vector<2x128xi32>
    %45 = arith.cmpi eq, %43, %44 : vector<2x128xi32>
    %46 = vector.broadcast %38 : f32 to vector<2x128xf32>
    %47 = vector.broadcast %42 : f32 to vector<2x128xf32>
    %48 = arith.select %45, %46, %47 : vector<2x128xi1>, vector<2x128xf32>
    %c0_15 = arith.constant 0 : index
    %c0_16 = arith.constant 0 : index
    %c0_17 = arith.constant 0 : index
    %c0_18 = arith.constant 0 : index
    %49 = vector.load %arg5[%c0_15, %c0_16, %c0_17, %c0_18] : memref<1x1x2x128xf32, #tpu.memory_space<vmem>>, vector<1x1x2x128xf32>
    %50 = vector.shape_cast %49 : vector<1x1x2x128xf32> to vector<2x128xf32>
    %51 = vector.shape_cast %48 : vector<2x128xf32> to vector<1x1x2x128xf32>
    tpu.vector_store %arg5[%c0_15, %c0_16, %c0_17, %c0_18], %51 {strides = array<i32>} : memref<1x1x2x128xf32, #tpu.memory_space<vmem>>, vector<1x1x2x128xf32>,
    return
  }
  func.func @transform_0(%arg0: i32, %arg1: i32) -> (i32, i32, i32) {
    %c0_i32 = arith.constant 0 : i32
    %c0_i32_0 = arith.constant 0 : i32
    return %arg0, %c0_i32, %arg1 : i32, i32, i32
  }
  func.func @transform_1(%arg0: i32, %arg1: i32) -> (i32, i32, i32) {
    %c0_i32 = arith.constant 0 : i32
    %c0_i32_0 = arith.constant 0 : i32
    return %arg0, %c0_i32, %arg1 : i32, i32, i32
  }
  func.func @transform_2(%arg0: i32, %arg1: i32) -> (i32, i32, i32) {
    %c0_i32 = arith.constant 0 : i32
    %c0_i32_0 = arith.constant 0 : i32
    return %arg0, %c0_i32, %arg1 : i32, i32, i32
  }
  func.func @transform_3(%arg0: i32, %arg1: i32) -> (i32, i32, i32, i32) {
    %c0_i32 = arith.constant 0 : i32
    %c0_i32_0 = arith.constant 0 : i32
    %c0_i32_1 = arith.constant 0 : i32
    return %arg0, %arg1, %c0_i32, %c0_i32_0 : i32, i32, i32, i32
  }
}

</mosaic_0001>

<llo_original>
// kernel: kl_loss.1
$region0: #{kl_loss.1}
  #allocation0 [shape = 'u32[]', space=smem, size = 0x4, offset = 0x4, fixed_abs, tag = 'smem constant byte address 0x4 - core index']
  #allocation1 [shape = 'u32[144,128]{1,0:T(1,128)}', space=vmem, size = 0x12000, scoped, tag = 'internal scratch']
  %s0 = inlined_call_operand.vmem [shape: f32[2,4,256], index: 0, kind: input, shape index: {}]
  %s1 = inlined_call_operand.vmem [shape: f32[2,4,256], index: 1, kind: input, shape index: {}]
  %s2 = inlined_call_operand.vmem [shape: f32[2,4,256], index: 2, kind: input, shape index: {}]
  %s3 = inlined_call_operand.vmem [shape: f32[2,1,2,128], index: 3, kind: output, shape index: {}]
  %s4 = sld [smem:[#allocation0]]
  $region45: #{kl_loss.1} parent=0
    _
  %s6 = ssub.s32 1, %s4
  %s7 = scalar_select 0, %s6, %s4
  loop: start=0, step=1, limit=4
  $region2: #{kl_loss.1} parent=0 // loop_pre_header
    _
  $region3: #{kl_loss.1} parent=0 // loop_header
    %s9 = sphi 0, %s13
    %p10 = scmp.ge.s32.totalorder %s9, 4
    %s16 = sphi 0, %s28
    %s17 = sphi 0, %s24
    %s18 = sphi 0, %s16
    %s19 = sphi 0, %s17
    %s20 = sphi 0, %s18
    %s21 = sphi 0, %s19
    %s33 = sphi 0, %s35
    %s36 = sphi 0, %s33
    %s37 = sphi 0, %s36
    %s53 = sphi 0, %s37
    %s61 = sphi 0, %s63
    %s64 = sphi 0, %s61
    %s65 = sphi 0, %s64
    %s81 = sphi 0, %s65
    %s89 = sphi 0, %s91
    %s92 = sphi 0, %s89
    %s93 = sphi 0, %s92
    %s109 = sphi 0, %s93
    %s117 = sphi 0, %s119
    %s120 = sphi 0, %s117
    %s121 = sphi 0, %s120
    %s137 = sphi 0, %s121
  $region4: #{kl_loss.1} parent=0 // loop_header_branch
    %12 = sbr.rel (%p10) target = $region8
  $region5: #{kl_loss.1} parent=0 // loop_body
    %s14 = ssub.s32 %s9, 1
    %s15 = ssub.s32 %s9, 2
    %s22 = sadd.s32 1, %s17
    %p23 = scmp.ge.s32.totalorder %s22, 1
    %s24 = scalar_select %p23, 0, %s22
    %s25 = sadd.s32 1, %s16
    %s26 = scalar_select %p23, %s25, %s16
    %p27 = scmp.ge.s32.totalorder %s26, 2
    %s28 = scalar_select %p27, 0, %s26
    %s29 = ssub.s32 %s16, %s28
    %s30 = ssub.s32 %s17, %s24
    %s31 = sor.u32 %s29, %s30
    %p32 = scmp.eq.s32.totalorder %s31, 0
    %s34 = sadd.s32 %s33, 1
    %s35 = scalar_select %p32, %s33, %s34
    %p38 = pneg %p32
    %p39 = scmp.eq.s32.totalorder %s9, 1
    %p40 = por %p38, %p39
    %p41 = scmp.ne.s32.totalorder %s33, %s36
    %p42 = scmp.eq.s32.totalorder %s9, 0
    %p43 = por %p41, %p42
    %p44 = scmp.ne.s32.totalorder %s33, %s36
    %p45 = scmp.eq.s32.totalorder %s14, 1
    %p46 = por %p44, %p45
    %p47 = scmp.ne.s32.totalorder %s36, %s37
    %p48 = scmp.eq.s32.totalorder %s14, 0
    %p49 = por %p47, %p48
    %p50 = scmp.ne.s32.totalorder %s36, %s37
    %p51 = scmp.eq.s32.totalorder %s15, 1
    %p52 = por %p50, %p51
    %p54 = scmp.ne.s32.totalorder %s37, %s53
    %p55 = scmp.eq.s32.totalorder %s15, 0
    %p56 = por %p54, %p55
    %s57 = ssub.s32 %s16, %s28
    %s58 = ssub.s32 %s17, %s24
    %s59 = sor.u32 %s57, %s58
    %p60 = scmp.eq.s32.totalorder %s59, 0
    %s62 = sadd.s32 %s61, 1
    %s63 = scalar_select %p60, %s61, %s62
    %p66 = pneg %p60
    %p67 = scmp.eq.s32.totalorder %s9, 1
    %p68 = por %p66, %p67
    %p69 = scmp.ne.s32.totalorder %s61, %s64
    %p70 = scmp.eq.s32.totalorder %s9, 0
    %p71 = por %p69, %p70
    %p72 = scmp.ne.s32.totalorder %s61, %s64
    %p73 = scmp.eq.s32.totalorder %s14, 1
    %p74 = por %p72, %p73
    %p75 = scmp.ne.s32.totalorder %s64, %s65
    %p76 = scmp.eq.s32.totalorder %s14, 0
    %p77 = por %p75, %p76
    %p78 = scmp.ne.s32.totalorder %s64, %s65
    %p79 = scmp.eq.s32.totalorder %s15, 1
    %p80 = por %p78, %p79
    %p82 = scmp.ne.s32.totalorder %s65, %s81
    %p83 = scmp.eq.s32.totalorder %s15, 0
    %p84 = por %p82, %p83
    %s85 = ssub.s32 %s16, %s28
    %s86 = ssub.s32 %s17, %s24
    %s87 = sor.u32 %s85, %s86
    %p88 = scmp.eq.s32.totalorder %s87, 0
    %s90 = sadd.s32 %s89, 1
    %s91 = scalar_select %p88, %s89, %s90
    %p94 = pneg %p88
    %p95 = scmp.eq.s32.totalorder %s9, 1
    %p96 = por %p94, %p95
    %p97 = scmp.ne.s32.totalorder %s89, %s92
    %p98 = scmp.eq.s32.totalorder %s9, 0
    %p99 = por %p97, %p98
    %p100 = scmp.ne.s32.totalorder %s89, %s92
    %p101 = scmp.eq.s32.totalorder %s14, 1
    %p102 = por %p100, %p101
    %p103 = scmp.ne.s32.totalorder %s92, %s93
    %p104 = scmp.eq.s32.totalorder %s14, 0
    %p105 = por %p103, %p104
    %p106 = scmp.ne.s32.totalorder %s92, %s93
    %p107 = scmp.eq.s32.totalorder %s15, 1
    %p108 = por %p106, %p107
    %p110 = scmp.ne.s32.totalorder %s93, %s109
    %p111 = scmp.eq.s32.totalorder %s15, 0
    %p112 = por %p110, %p111
    %s113 = ssub.s32 %s16, %s28
    %s114 = ssub.s32 %s17, %s24
    %s115 = sor.u32 %s113, %s114
    %p116 = scmp.eq.s32.totalorder %s115, 0
    %s118 = sadd.s32 %s117, 1
    %s119 = scalar_select %p116, %s117, %s118
    %p122 = pneg %p116
    %p123 = scmp.eq.s32.totalorder %s9, 1
    %p124 = por %p122, %p123
    %p125 = scmp.ne.s32.totalorder %s117, %s120
    %p126 = scmp.eq.s32.totalorder %s9, 0
    %p127 = por %p125, %p126
    %p128 = scmp.ne.s32.totalorder %s117, %s120
    %p129 = scmp.eq.s32.totalorder %s14, 1
    %p130 = por %p128, %p129
    %p131 = scmp.ne.s32.totalorder %s120, %s121
    %p132 = scmp.eq.s32.totalorder %s14, 0
    %p133 = por %p131, %p132
    %p134 = scmp.ne.s32.totalorder %s120, %s121
    %p135 = scmp.eq.s32.totalorder %s15, 1
    %p136 = por %p134, %p135
    %p138 = scmp.ne.s32.totalorder %s121, %s137
    %p139 = scmp.eq.s32.totalorder %s15, 0
    %p140 = por %p138, %p139
    %p141 = scmp.le.s32.totalorder 1, %s9
    %p142 = scmp.lt.s32.totalorder %s9, 3
    %p143 = pnand %p141, %p142
    %p144 = pneg %p143
    // Predicated region
    $region9: #{kl_loss.1} parent=5 // pred_check
      _
    $region10: #{kl_loss.1} parent=5 // pred_check_branch
      %146 = sbr.rel (%p143) target = $region12
    $region11: #{kl_loss.1} parent=5 // pred_region
      %s147 = ssub.s32 %s9, 1
    $region12: #{kl_loss.1} parent=5 // pred_fallthru
      _
    %p148 = scmp.lt.s32.totalorder %s9, 2
    // Predicated region
    $region13: #{kl_loss.1} parent=5 // pred_check
      %p149 = pneg %p148
    $region14: #{kl_loss.1} parent=5 // pred_check_branch
      %151 = sbr.rel (%p149) target = $region16
    $region15: #{kl_loss.1} parent=5 // pred_region
      // Predicated region
      $region17: #{kl_loss.1} parent=15 // pred_check
        %p152 = pneg %p43
      $region18: #{kl_loss.1} parent=15 // pred_check_branch
        %154 = sbr.rel (%p152) target = $region20
      $region19: #{kl_loss.1} parent=15 // pred_region
        %s155 = smul.u32 2, %s17
        %p156 = scmp.lt.s32.totalorder %s16, 1
        %s157 = scalar_select %p156, %s16, 1
        %p158 = scmp.lt.s32.totalorder %s155, 1
        %s159 = scalar_select %p158, %s155, 1
        %s160 = smul.addr %s157, 2
        %s161 = sadd.s32 %s159, %s160
        %s162 = smul.addr %s161, 4
        %s163 = scalar_lea.vmem %s0, %s162
        %s164 = smul.u32 2, %s17
      $region20: #{kl_loss.1} parent=15 // pred_fallthru
        _
      // Predicated region
      $region21: #{kl_loss.1} parent=15 // pred_check
        %p165 = pneg %p71
      $region22: #{kl_loss.1} parent=15 // pred_check_branch
        %167 = sbr.rel (%p165) target = $region24
      $region23: #{kl_loss.1} parent=15 // pred_region
        %s168 = smul.u32 2, %s17
        %p169 = scmp.lt.s32.totalorder %s16, 1
        %s170 = scalar_select %p169, %s16, 1
        %p171 = scmp.lt.s32.totalorder %s168, 1
        %s172 = scalar_select %p171, %s168, 1
        %s173 = smul.addr %s170, 2
        %s174 = sadd.s32 %s172, %s173
        %s175 = smul.addr %s174, 4
        %s176 = scalar_lea.vmem %s1, %s175
        %s177 = smul.u32 2, %s17
      $region24: #{kl_loss.1} parent=15 // pred_fallthru
        _
      // Predicated region
      $region25: #{kl_loss.1} parent=15 // pred_check
        %p178 = pneg %p99
      $region26: #{kl_loss.1} parent=15 // pred_check_branch
        %180 = sbr.rel (%p178) target = $region28
      $region27: #{kl_loss.1} parent=15 // pred_region
        %s181 = smul.u32 2, %s17
        %p182 = scmp.lt.s32.totalorder %s16, 1
        %s183 = scalar_select %p182, %s16, 1
        %p184 = scmp.lt.s32.totalorder %s181, 1
        %s185 = scalar_select %p184, %s181, 1
        %s186 = smul.addr %s183, 2
        %s187 = sadd.s32 %s185, %s186
        %s188 = smul.addr %s187, 4
        %s189 = scalar_lea.vmem %s2, %s188
        %s190 = smul.u32 2, %s17
      $region28: #{kl_loss.1} parent=15 // pred_fallthru
        _
    $region16: #{kl_loss.1} parent=5 // pred_fallthru
      _
    %p191 = scmp.le.s32.totalorder 1, %s9
    %p192 = scmp.lt.s32.totalorder %s9, 3
    %p193 = pnand %p191, %p192
    %p194 = pneg %p193
    // Predicated region
    $region29: #{kl_loss.1} parent=5 // pred_check
      _
    $region30: #{kl_loss.1} parent=5 // pred_check_branch
      %196 = sbr.rel (%p193) target = $region32
    $region31: #{kl_loss.1} parent=5 // pred_region
      %s197 = ssub.s32 %s9, 1
      %s198 = smul.u32 2, %s19
      %p199 = scmp.lt.s32.totalorder %s18, 1
      %s200 = scalar_select %p199, %s18, 1
      %p201 = scmp.lt.s32.totalorder %s198, 1
      %s202 = scalar_select %p201, %s198, 1
      %s203 = smul.addr %s200, 2
      %s204 = sadd.s32 %s202, %s203
      %s205 = smul.addr %s204, 4
      %s206 = scalar_lea.vmem %s0, %s205
      %p207 = pneg %p49
      %p208 = pneg %p46
      %s209 = smul.u32 2, %s19
      %p210 = scmp.lt.s32.totalorder %s18, 1
      %s211 = scalar_select %p210, %s18, 1
      %p212 = scmp.lt.s32.totalorder %s209, 1
      %s213 = scalar_select %p212, %s209, 1
      %s214 = smul.addr %s211, 2
      %s215 = sadd.s32 %s213, %s214
      %s216 = smul.addr %s215, 4
      %s217 = scalar_lea.vmem %s1, %s216
      %p218 = pneg %p77
      %p219 = pneg %p74
      %s220 = smul.u32 2, %s19
      %p221 = scmp.lt.s32.totalorder %s18, 1
      %s222 = scalar_select %p221, %s18, 1
      %p223 = scmp.lt.s32.totalorder %s220, 1
      %s224 = scalar_select %p223, %s220, 1
      %s225 = smul.addr %s222, 2
      %s226 = sadd.s32 %s224, %s225
      %s227 = smul.addr %s226, 4
      %s228 = scalar_lea.vmem %s2, %s227
      %p229 = pneg %p105
      %p230 = pneg %p102
      %p231 = pneg %p133
      %p232 = pneg %p130
      %p233 = scmp.lt.s32.totalorder %s18, 1
      %s234 = scalar_select %p233, %s18, 1
      %p235 = scmp.lt.s32.totalorder %s19, 0
      %s236 = scalar_select %p235, %s19, 0
      %s237 = sadd.s32 %s236, %s234
      %s238 = smul.addr %s237, 2
      %s239 = scalar_lea.vmem %s3, %s238
      %s240 = smul.u32 2, %s19
      %p241 = scmp.lt.s32.totalorder %s18, 1
      %s242 = scalar_select %p241, %s18, 1
      %p243 = scmp.lt.s32.totalorder %s240, 1
      %s244 = scalar_select %p243, %s240, 1
      %s245 = smul.addr %s242, 2
      %s246 = sadd.s32 %s244, %s245
      %s247 = smul.addr %s246, 4
      %s248 = scalar_lea.vmem %s0, %s247
      %s249 = smul.u32 2, %s19
      %s250 = smul.u32 2, %s19
      %p251 = scmp.lt.s32.totalorder %s18, 1
      %s252 = scalar_select %p251, %s18, 1
      %p253 = scmp.lt.s32.totalorder %s250, 1
      %s254 = scalar_select %p253, %s250, 1
      %s255 = smul.addr %s252, 2
      %s256 = sadd.s32 %s254, %s255
      %s257 = smul.addr %s256, 4
      %s258 = scalar_lea.vmem %s1, %s257
      %s259 = smul.u32 2, %s19
      %s260 = smul.u32 2, %s19
      %p261 = scmp.lt.s32.totalorder %s18, 1
      %s262 = scalar_select %p261, %s18, 1
      %p263 = scmp.lt.s32.totalorder %s260, 1
      %s264 = scalar_select %p263, %s260, 1
      %s265 = smul.addr %s262, 2
      %s266 = sadd.s32 %s264, %s265
      %s267 = smul.addr %s266, 4
      %s268 = scalar_lea.vmem %s2, %s267
      %s269 = smul.u32 2, %s19
      %p270 = scmp.lt.s32.totalorder %s18, 1
      %s271 = scalar_select %p270, %s18, 1
      %p272 = scmp.lt.s32.totalorder %s19, 0
      %s273 = scalar_select %p272, %s19, 0
      %s274 = sadd.s32 %s273, %s271
      %s275 = smul.addr %s274, 2
      %s276 = scalar_lea.vmem %s3, %s275
      %v277 = vld [vmem:[%s248] sm:$0xff]
      %v278 = vld [vmem:[%s258] sm:$0xff]
      %v279 = vld [vmem:[%s268] sm:$0xff]
      %v281 = vcombine.high %v277, %v277
      %vm283 = vcmask 1043456
      %v284 = vsel %vm283, %v277, -inf
      %v285 = vrot.slane %v284, 4
      %v286 = vmax.f32 %v284, %v285
      %v287 = vrot.slane %v286, 2
      %v288 = vmax.f32 %v286, %v287
      %v289 = vrot.slane %v288, 1
      %v290 = vmax.f32 %v288, %v289
      %v291 = vsel %vm283, %v281, -inf
      %v292 = vrot.slane %v291, 4
      %v293 = vmax.f32 %v291, %v292
      %v294 = vrot.slane %v293, 2
      %v295 = vmax.f32 %v293, %v294
      %v296 = vrot.slane %v295, 1
      %v297 = vmax.f32 %v295, %v296
      %v300 = vcombine.low %v290, %v297
      %v302 = vsub.f32 %v277, %v300
      %v303 = vmul.f32 %v302, 1.442695
      %v304 = vpow.pop %v303
      %v306 = vcombine.high %v304, %v304
      %v308 = vsel %vm283, %v304, 0.0
      %v309 = vrot.slane %v308, 4
      %v310 = vadd.f32 %v308, %v309
      %v311 = vrot.slane %v310, 2
      %v312 = vadd.f32 %v310, %v311
      %v313 = vrot.slane %v312, 1
      %v314 = vadd.f32 %v312, %v313
      %v315 = vsel %vm283, %v306, 0.0
      %v316 = vrot.slane %v315, 4
      %v317 = vadd.f32 %v315, %v316
      %v318 = vrot.slane %v317, 2
      %v319 = vadd.f32 %v317, %v318
      %v320 = vrot.slane %v319, 1
      %v321 = vadd.f32 %v319, %v320
      %v322 = vrcp.pop %v314
      %v323 = vrcp.pop %v321
      %v326 = vcombine.low %v322, %v323
      %v328 = vmul.f32 %v304, %v326
      %v329 = vlog2.pop %v314
      %v330 = vmul.f32 %v329, 0.6931472
      %v331 = vlog2.pop %v321
      %v332 = vmul.f32 %v331, 0.6931472
      %v335 = vcombine.low %v330, %v332
      %v337 = vsub.f32 %v302, %v335
      %v339 = vcombine.high %v278, %v278
      %v341 = vsel %vm283, %v278, -inf
      %v342 = vrot.slane %v341, 4
      %v343 = vmax.f32 %v341, %v342
      %v344 = vrot.slane %v343, 2
      %v345 = vmax.f32 %v343, %v344
      %v346 = vrot.slane %v345, 1
      %v347 = vmax.f32 %v345, %v346
      %v348 = vsel %vm283, %v339, -inf
      %v349 = vrot.slane %v348, 4
      %v350 = vmax.f32 %v348, %v349
      %v351 = vrot.slane %v350, 2
      %v352 = vmax.f32 %v350, %v351
      %v353 = vrot.slane %v352, 1
      %v354 = vmax.f32 %v352, %v353
      %v357 = vcombine.low %v347, %v354
      %v359 = vsub.f32 %v278, %v357
      %v360 = vmul.f32 %v359, 1.442695
      %v361 = vpow.pop %v360
      %v363 = vcombine.high %v361, %v361
      %v365 = vsel %vm283, %v361, 0.0
      %v366 = vrot.slane %v365, 4
      %v367 = vadd.f32 %v365, %v366
      %v368 = vrot.slane %v367, 2
      %v369 = vadd.f32 %v367, %v368
      %v370 = vrot.slane %v369, 1
      %v371 = vadd.f32 %v369, %v370
      %v372 = vsel %vm283, %v363, 0.0
      %v373 = vrot.slane %v372, 4
      %v374 = vadd.f32 %v372, %v373
      %v375 = vrot.slane %v374, 2
      %v376 = vadd.f32 %v374, %v375
      %v377 = vrot.slane %v376, 1
      %v378 = vadd.f32 %v376, %v377
      %v379 = vlog2.pop %v371
      %v380 = vmul.f32 %v379, 0.6931472
      %v381 = vlog2.pop %v378
      %v382 = vmul.f32 %v381, 0.6931472
      %v385 = vcombine.low %v380, %v382
      %v387 = vsub.f32 %v359, %v385
      %v388 = vsub.f32 0.0, %v279
      %v389 = vmul.f32 %v388, %v337
      %v390 = vsub.f32 0.0, %v328
      %v391 = vmul.f32 %v390, %v387
      %v393 = vcombine.high %v389, %v389
      %v395 = vsel %vm283, %v389, 0.0
      %v396 = vsel %vm283, %v393, 0.0
      %v397 = vadd.f32 %v395, %v396
      %398 = vadd.xlane.f32.xlu0 %v397
      %v399 = vpop.xlane.xlu0 %398
      %v400 = vrot.slane %v399, 4
      %v401 = vadd.f32 %v399, %v400
      %v402 = vrot.slane %v401, 2
      %v403 = vadd.f32 %v401, %v402
      %v404 = vrot.slane %v403, 1
      %v405 = vadd.f32 %v403, %v404
      %s406 = vtos %v405
      %v408 = vcombine.high %v391, %v391
      %v410 = vsel %vm283, %v391, 0.0
      %v411 = vsel %vm283, %v408, 0.0
      %v412 = vadd.f32 %v410, %v411
      %413 = vadd.xlane.f32.xlu0 %v412
      %v414 = vpop.xlane.xlu0 %413
      %v415 = vrot.slane %v414, 4
      %v416 = vadd.f32 %v414, %v415
      %v417 = vrot.slane %v416, 2
      %v418 = vadd.f32 %v416, %v417
      %v419 = vrot.slane %v418, 1
      %v420 = vadd.f32 %v418, %v419
      %s421 = vtos %v420
      %v422 = vlaneseq
      %v423 = vshrl.u32 %v422, 7
      %vm424 = vcmp.eq.s32.totalorder %v423, 0
      %v425 = vstv %s406
      %v426 = vstv %s421
      %v427 = vsel %vm424, %v425, %v426
      %428 = vst [vmem:[%s276] sm:$0x3] %v427
      %p429 = scmp.lt.s32.totalorder %s18, 1
      %s430 = scalar_select %p429, %s18, 1
      %p431 = scmp.lt.s32.totalorder %s19, 0
      %s432 = scalar_select %p431, %s19, 0
      %s433 = sadd.s32 %s432, %s430
      %s434 = smul.addr %s433, 2
      %s435 = scalar_lea.vmem %s3, %s434
      // Predicated region
      $region33: #{kl_loss.1} parent=31 // pred_check
        %p436 = pneg %p130
      $region34: #{kl_loss.1} parent=31 // pred_check_branch
        %438 = sbr.rel (%p436) target = $region36
      $region35: #{kl_loss.1} parent=31 // pred_region
        _
      $region36: #{kl_loss.1} parent=31 // pred_fallthru
        _
    $region32: #{kl_loss.1} parent=5 // pred_fallthru
      _
    %p439 = scmp.le.s32.totalorder 2, %s9
    // Predicated region
    $region37: #{kl_loss.1} parent=5 // pred_check
      %p440 = pneg %p439
    $region38: #{kl_loss.1} parent=5 // pred_check_branch
      %442 = sbr.rel (%p440) target = $region40
    $region39: #{kl_loss.1} parent=5 // pred_region
      %s443 = ssub.s32 %s9, 2
      // Predicated region
      $region41: #{kl_loss.1} parent=39 // pred_check
        %p444 = pneg %p136
      $region42: #{kl_loss.1} parent=39 // pred_check_branch
        %446 = sbr.rel (%p444) target = $region44
      $region43: #{kl_loss.1} parent=39 // pred_region
        %p447 = scmp.lt.s32.totalorder %s20, 1
        %s448 = scalar_select %p447, %s20, 1
        %p449 = scmp.lt.s32.totalorder %s21, 0
        %s450 = scalar_select %p449, %s21, 0
        %s451 = sadd.s32 %s450, %s448
        %s452 = smul.addr %s451, 2
        %s453 = scalar_lea.vmem %s3, %s452
      $region44: #{kl_loss.1} parent=39 // pred_fallthru
        _
    $region40: #{kl_loss.1} parent=5 // pred_fallthru
      _
  $region6: #{kl_loss.1} parent=0 // loop_footer
    %s13 = sadd.s32 1, %s9
  $region7: #{kl_loss.1} parent=0 // loop_footer_branch
    %8 = sbr.rel target = $region3
  $region8: #{kl_loss.1} parent=0 // loop_exit
    _

</llo_original>
